<compile_context>
chip_gen: v5e
topology: v5e:2x2
jax: 0.10.0
libtpu: 0.0.40
codegen_flags: <defaults>
</compile_context>

<pallas_src>
import jax
import jax.numpy as jnp
from jax.experimental import pallas as pl
from jax.experimental.pallas import tpu as pltpu


def _fwd_kernel(tok_ref, p_ref, b_ref, o_ref):
    # tok_ref: (S, tB) int8  VMEM  -- token ids, batch on the lane axis
    # p_ref:   (V,)    f32   SMEM  -- folded table  emb_table @ w  (p[0] == 0)
    # b_ref:   (1,)    f32   SMEM  -- linear bias
    # o_ref:   (1, tB) f32   VMEM  -- sigmoid(logits), lane-dense output row
    seq_len = tok_ref.shape[0]
    vocab = p_ref.shape[0]

    toks = tok_ref[...].astype(jnp.int32)          # upcast the tile once (VPU)

    # Gather p[toks] without a dynamic gather: vocab is tiny, so unroll a
    # compare-select per vocab entry.  Each token matches exactly one entry,
    # so a select chain (no accumulate-add) is bit-exact and drops one VALU
    # add per entry.  Out-of-range ids fall through to 0.  For vocabularies
    # beyond ~128 entries switch to a real gather / one-hot MXU matmul.
    vals = jnp.zeros(toks.shape, jnp.float32)
    for v in range(vocab):
        vals = jnp.where(toks == v, p_ref[v], vals)

    # AvgPool1d(sentence_length) == mean over the sentence (sublane) axis,
    # fused with the (already folded) linear bias and the sigmoid.
    logits = jnp.sum(vals, axis=0, keepdims=True) * (1.0 / seq_len) + b_ref[0]
    o_ref[...] = jax.nn.sigmoid(logits)            # (1, tB) lane-dense store


def fold_params(emb_table, w, b):
    """Fold the classifier into the embedding table.

    Exact (mean and dot commute).  Call ONCE per weight update, NOT per
    forward call.  padding_idx=0 stays honored as long as emb_table row 0 is
    all-zero (PyTorch keeps it zero), so p[0] == 0.
    """
    V = emb_table.shape[0]
    p = (emb_table.astype(jnp.float32) @ w.astype(jnp.float32)).reshape(V)
    bias = jnp.asarray(b, jnp.float32).reshape(1)
    return p, bias


def _round_up(x, m):
    return (x + m - 1) // m * m


def forward_folded_sb(tokens_sb, p, bias, *, max_tile=2048):
    """Hot path: tokens already int8 in (S, B) layout (batch on lanes)."""
    S, B = tokens_sb.shape

    # Tile the batch (lane) axis: one big tile unless B is huge.  A block is
    # only S*tB bytes of int8 tokens (KB scale), so VMEM is never the
    # constraint on any generation; the goal is simply the fewest grid steps
    # with lane-dense (multiple-of-128) tiles and unmasked output stores.
    if B <= 128:
        Bp, tB = B, B                               # single full-extent tile
    else:
        Bp = _round_up(B, 128)                      # lane-dense batch
        tB = min(Bp, max_tile)
        Bp = _round_up(Bp, tB)
    if Bp != B:
        tokens_sb = jnp.pad(tokens_sb, ((0, 0), (0, Bp - B)))  # pad token = 0
    grid = (Bp // tB,)

    # Split across TensorCores only when there is more than one big tile
    # (v7x 2-TC win needs enough batch per core; tiny work stays on one TC).
    semantics = ("parallel",) if grid[0] > 1 else ("arbitrary",)

    out_row = pl.pallas_call(
        _fwd_kernel,
        out_shape=jax.ShapeDtypeStruct((1, Bp), jnp.float32),
        grid=grid,
        in_specs=[
            pl.BlockSpec((S, tB), lambda i: (0, i)),            # tokens (VMEM)
            pl.BlockSpec(memory_space=pltpu.MemorySpace.SMEM),   # folded table
            pl.BlockSpec(memory_space=pltpu.MemorySpace.SMEM),   # bias scalar
        ],
        out_specs=pl.BlockSpec((1, tB), lambda i: (0, i)),       # lane-dense row
        compiler_params=pltpu.CompilerParams(dimension_semantics=semantics),
    )(tokens_sb, p, bias)

    return out_row.reshape(Bp, 1)[:B]               # (B, 1)


def torch_model_forward(x_tokens, p, bias, *, max_tile=2048):
    """Equivalent of TorchModel.forward(x) with y=None, using folded params.

    x_tokens: (B, S) integer token ids (the PyTorch layout)
    p, bias:  output of fold_params (computed once per weight update)
    returns   (B, 1) f32 probabilities

    Production callers should hand int8 (S, B) tokens straight to
    forward_folded_sb and skip this single fused cast+transpose launch.
    """
    tokens_sb = x_tokens.T.astype(jnp.int8)         # one fused XLA op, S*B bytes
    return forward_folded_sb(tokens_sb, p, bias, max_tile=max_tile)

    # TODO(synk): the optional MSE-loss branch (y is not None) is trivial
    # elementwise math and is left to XLA outside the kernel.


if __name__ == "__main__":
    # Hyperparameters implied by the module: vocab = pad + 26 letters + unk.
    vocab_size = 28
    vector_dim = 32
    sentence_length = 6
    batch = 256  # multiple of 128 -> single lane-dense tile, grid=(1,)

    key = jax.random.PRNGKey(0)
    k_emb, k_w, k_b, k_tok = jax.random.split(key, 4)

    # nn.Embedding(len(vocab), vector_dim, padding_idx=0): row 0 zeroed.
    emb_table = jax.random.normal(k_emb, (vocab_size, vector_dim), jnp.float32)
    emb_table = emb_table.at[0].set(0.0)

    # nn.Linear(vector_dim, 1): stored as (D, 1) weight and (1,) bias.
    w = (jax.random.normal(k_w, (vector_dim, 1), jnp.float32)
         * (1.0 / jnp.sqrt(vector_dim)))
    b = jax.random.normal(k_b, (1,), jnp.float32) * 0.01

    # Integer token ids, some zeros (padding).
    x_tokens = jax.random.randint(k_tok, (batch, sentence_length),
                                  0, vocab_size, jnp.int32)

    # Fold once per weight update (hoisted out of the per-forward path).
    p, bias = fold_params(emb_table, w, b)

    y_pred = jax.block_until_ready(torch_model_forward(x_tokens, p, bias))

    # Pure-JAX reference of the (unfolded) PyTorch forward pass.
    x_emb = jnp.take(emb_table, x_tokens, axis=0)          # embedding
    pooled = jnp.mean(x_emb, axis=1)                       # transpose+AvgPool1d+squeeze
    ref = jax.nn.sigmoid(pooled @ w + b.reshape(1, 1))     # Linear + sigmoid

    assert y_pred.shape == (batch, 1)
    assert jnp.allclose(y_pred, ref, atol=1e-5, rtol=1e-5), (y_pred[:4], ref[:4])

    print("KERNEL_OK")
</pallas_src>

<mosaic_0001>
module attributes {stable_mosaic.version = 11 : i64} {
  func.func @_fwd_kernel(%arg0: i32, %arg1: memref<6x256xi8, #tpu.memory_space<vmem>>, %arg2: memref<28xf32, #tpu.memory_space<smem>>, %arg3: memref<1xf32, #tpu.memory_space<smem>>, %arg4: memref<1x256xf32, #tpu.memory_space<vmem>>) attributes {dimension_semantics = [#tpu.dimension_semantics<arbitrary>], iteration_bounds = array<i64: 1>, scalar_prefetch = 0 : i64, scratch_operands = 0 : i64, tpu.core_type = #tpu.core_type<tc>, window_params = [{transform_indices = @transform_0, window_bounds = array<i64: 6, 256>}, {transform_indices = @transform_1, window_bounds = array<i64: 28>}, {transform_indices = @transform_2, window_bounds = array<i64: 1>}, {transform_indices = @transform_3, window_bounds = array<i64: 1, 256>}]} {
    %c0 = arith.constant 0 : index
    %c0_0 = arith.constant 0 : index
    %0 = vector.load %arg1[%c0, %c0_0] : memref<6x256xi8, #tpu.memory_space<vmem>>, vector<6x256xi8>
    %1 = arith.extsi %0 : vector<6x256xi8> to vector<6x256xi32>
    %cst = arith.constant 0.000000e+00 : f32
    %2 = vector.broadcast %cst : f32 to vector<6x256xf32>
    %c0_i32 = arith.constant 0 : i32
    %3 = vector.broadcast %c0_i32 : i32 to vector<6x256xi32>
    %4 = arith.cmpi eq, %1, %3 : vector<6x256xi32>
    %c0_1 = arith.constant 0 : index
    %5 = memref.load %arg2[%c0_1] : memref<28xf32, #tpu.memory_space<smem>>
    %6 = vector.broadcast %5 : f32 to vector<6x256xf32>
    %7 = arith.select %4, %6, %2 : vector<6x256xi1>, vector<6x256xf32>
    %c1_i32 = arith.constant 1 : i32
    %8 = vector.broadcast %c1_i32 : i32 to vector<6x256xi32>
    %9 = arith.cmpi eq, %1, %8 : vector<6x256xi32>
    %c1 = arith.constant 1 : index
    %10 = memref.load %arg2[%c1] : memref<28xf32, #tpu.memory_space<smem>>
    %11 = vector.broadcast %10 : f32 to vector<6x256xf32>
    %12 = arith.select %9, %11, %7 : vector<6x256xi1>, vector<6x256xf32>
    %c2_i32 = arith.constant 2 : i32
    %13 = vector.broadcast %c2_i32 : i32 to vector<6x256xi32>
    %14 = arith.cmpi eq, %1, %13 : vector<6x256xi32>
    %c2 = arith.constant 2 : index
    %15 = memref.load %arg2[%c2] : memref<28xf32, #tpu.memory_space<smem>>
    %16 = vector.broadcast %15 : f32 to vector<6x256xf32>
    %17 = arith.select %14, %16, %12 : vector<6x256xi1>, vector<6x256xf32>
    %c3_i32 = arith.constant 3 : i32
    %18 = vector.broadcast %c3_i32 : i32 to vector<6x256xi32>
    %19 = arith.cmpi eq, %1, %18 : vector<6x256xi32>
    %c3 = arith.constant 3 : index
    %20 = memref.load %arg2[%c3] : memref<28xf32, #tpu.memory_space<smem>>
    %21 = vector.broadcast %20 : f32 to vector<6x256xf32>
    %22 = arith.select %19, %21, %17 : vector<6x256xi1>, vector<6x256xf32>
    %c4_i32 = arith.constant 4 : i32
    %23 = vector.broadcast %c4_i32 : i32 to vector<6x256xi32>
    %24 = arith.cmpi eq, %1, %23 : vector<6x256xi32>
    %c4 = arith.constant 4 : index
    %25 = memref.load %arg2[%c4] : memref<28xf32, #tpu.memory_space<smem>>
    %26 = vector.broadcast %25 : f32 to vector<6x256xf32>
    %27 = arith.select %24, %26, %22 : vector<6x256xi1>, vector<6x256xf32>
    %c5_i32 = arith.constant 5 : i32
    %28 = vector.broadcast %c5_i32 : i32 to vector<6x256xi32>
    %29 = arith.cmpi eq, %1, %28 : vector<6x256xi32>
    %c5 = arith.constant 5 : index
    %30 = memref.load %arg2[%c5] : memref<28xf32, #tpu.memory_space<smem>>
    %31 = vector.broadcast %30 : f32 to vector<6x256xf32>
    %32 = arith.select %29, %31, %27 : vector<6x256xi1>, vector<6x256xf32>
    %c6_i32 = arith.constant 6 : i32
    %33 = vector.broadcast %c6_i32 : i32 to vector<6x256xi32>
    %34 = arith.cmpi eq, %1, %33 : vector<6x256xi32>
    %c6 = arith.constant 6 : index
    %35 = memref.load %arg2[%c6] : memref<28xf32, #tpu.memory_space<smem>>
    %36 = vector.broadcast %35 : f32 to vector<6x256xf32>
    %37 = arith.select %34, %36, %32 : vector<6x256xi1>, vector<6x256xf32>
    %c7_i32 = arith.constant 7 : i32
    %38 = vector.broadcast %c7_i32 : i32 to vector<6x256xi32>
    %39 = arith.cmpi eq, %1, %38 : vector<6x256xi32>
    %c7 = arith.constant 7 : index
    %40 = memref.load %arg2[%c7] : memref<28xf32, #tpu.memory_space<smem>>
    %41 = vector.broadcast %40 : f32 to vector<6x256xf32>
    %42 = arith.select %39, %41, %37 : vector<6x256xi1>, vector<6x256xf32>
    %c8_i32 = arith.constant 8 : i32
    %43 = vector.broadcast %c8_i32 : i32 to vector<6x256xi32>
    %44 = arith.cmpi eq, %1, %43 : vector<6x256xi32>
    %c8 = arith.constant 8 : index
    %45 = memref.load %arg2[%c8] : memref<28xf32, #tpu.memory_space<smem>>
    %46 = vector.broadcast %45 : f32 to vector<6x256xf32>
    %47 = arith.select %44, %46, %42 : vector<6x256xi1>, vector<6x256xf32>
    %c9_i32 = arith.constant 9 : i32
    %48 = vector.broadcast %c9_i32 : i32 to vector<6x256xi32>
    %49 = arith.cmpi eq, %1, %48 : vector<6x256xi32>
    %c9 = arith.constant 9 : index
    %50 = memref.load %arg2[%c9] : memref<28xf32, #tpu.memory_space<smem>>
    %51 = vector.broadcast %50 : f32 to vector<6x256xf32>
    %52 = arith.select %49, %51, %47 : vector<6x256xi1>, vector<6x256xf32>
    %c10_i32 = arith.constant 10 : i32
    %53 = vector.broadcast %c10_i32 : i32 to vector<6x256xi32>
    %54 = arith.cmpi eq, %1, %53 : vector<6x256xi32>
    %c10 = arith.constant 10 : index
    %55 = memref.load %arg2[%c10] : memref<28xf32, #tpu.memory_space<smem>>
    %56 = vector.broadcast %55 : f32 to vector<6x256xf32>
    %57 = arith.select %54, %56, %52 : vector<6x256xi1>, vector<6x256xf32>
    %c11_i32 = arith.constant 11 : i32
    %58 = vector.broadcast %c11_i32 : i32 to vector<6x256xi32>
    %59 = arith.cmpi eq, %1, %58 : vector<6x256xi32>
    %c11 = arith.constant 11 : index
    %60 = memref.load %arg2[%c11] : memref<28xf32, #tpu.memory_space<smem>>
    %61 = vector.broadcast %60 : f32 to vector<6x256xf32>
    %62 = arith.select %59, %61, %57 : vector<6x256xi1>, vector<6x256xf32>
    %c12_i32 = arith.constant 12 : i32
    %63 = vector.broadcast %c12_i32 : i32 to vector<6x256xi32>
    %64 = arith.cmpi eq, %1, %63 : vector<6x256xi32>
    %c12 = arith.constant 12 : index
    %65 = memref.load %arg2[%c12] : memref<28xf32, #tpu.memory_space<smem>>
    %66 = vector.broadcast %65 : f32 to vector<6x256xf32>
    %67 = arith.select %64, %66, %62 : vector<6x256xi1>, vector<6x256xf32>
    %c13_i32 = arith.constant 13 : i32
    %68 = vector.broadcast %c13_i32 : i32 to vector<6x256xi32>
    %69 = arith.cmpi eq, %1, %68 : vector<6x256xi32>
    %c13 = arith.constant 13 : index
    %70 = memref.load %arg2[%c13] : memref<28xf32, #tpu.memory_space<smem>>
    %71 = vector.broadcast %70 : f32 to vector<6x256xf32>
    %72 = arith.select %69, %71, %67 : vector<6x256xi1>, vector<6x256xf32>
    %c14_i32 = arith.constant 14 : i32
    %73 = vector.broadcast %c14_i32 : i32 to vector<6x256xi32>
    %74 = arith.cmpi eq, %1, %73 : vector<6x256xi32>
    %c14 = arith.constant 14 : index
    %75 = memref.load %arg2[%c14] : memref<28xf32, #tpu.memory_space<smem>>
    %76 = vector.broadcast %75 : f32 to vector<6x256xf32>
    %77 = arith.select %74, %76, %72 : vector<6x256xi1>, vector<6x256xf32>
    %c15_i32 = arith.constant 15 : i32
    %78 = vector.broadcast %c15_i32 : i32 to vector<6x256xi32>
    %79 = arith.cmpi eq, %1, %78 : vector<6x256xi32>
    %c15 = arith.constant 15 : index
    %80 = memref.load %arg2[%c15] : memref<28xf32, #tpu.memory_space<smem>>
    %81 = vector.broadcast %80 : f32 to vector<6x256xf32>
    %82 = arith.select %79, %81, %77 : vector<6x256xi1>, vector<6x256xf32>
    %c16_i32 = arith.constant 16 : i32
    %83 = vector.broadcast %c16_i32 : i32 to vector<6x256xi32>
    %84 = arith.cmpi eq, %1, %83 : vector<6x256xi32>
    %c16 = arith.constant 16 : index
    %85 = memref.load %arg2[%c16] : memref<28xf32, #tpu.memory_space<smem>>
    %86 = vector.broadcast %85 : f32 to vector<6x256xf32>
    %87 = arith.select %84, %86, %82 : vector<6x256xi1>, vector<6x256xf32>
    %c17_i32 = arith.constant 17 : i32
    %88 = vector.broadcast %c17_i32 : i32 to vector<6x256xi32>
    %89 = arith.cmpi eq, %1, %88 : vector<6x256xi32>
    %c17 = arith.constant 17 : index
    %90 = memref.load %arg2[%c17] : memref<28xf32, #tpu.memory_space<smem>>
    %91 = vector.broadcast %90 : f32 to vector<6x256xf32>
    %92 = arith.select %89, %91, %87 : vector<6x256xi1>, vector<6x256xf32>
    %c18_i32 = arith.constant 18 : i32
    %93 = vector.broadcast %c18_i32 : i32 to vector<6x256xi32>
    %94 = arith.cmpi eq, %1, %93 : vector<6x256xi32>
    %c18 = arith.constant 18 : index
    %95 = memref.load %arg2[%c18] : memref<28xf32, #tpu.memory_space<smem>>
    %96 = vector.broadcast %95 : f32 to vector<6x256xf32>
    %97 = arith.select %94, %96, %92 : vector<6x256xi1>, vector<6x256xf32>
    %c19_i32 = arith.constant 19 : i32
    %98 = vector.broadcast %c19_i32 : i32 to vector<6x256xi32>
    %99 = arith.cmpi eq, %1, %98 : vector<6x256xi32>
    %c19 = arith.constant 19 : index
    %100 = memref.load %arg2[%c19] : memref<28xf32, #tpu.memory_space<smem>>
    %101 = vector.broadcast %100 : f32 to vector<6x256xf32>
    %102 = arith.select %99, %101, %97 : vector<6x256xi1>, vector<6x256xf32>
    %c20_i32 = arith.constant 20 : i32
    %103 = vector.broadcast %c20_i32 : i32 to vector<6x256xi32>
    %104 = arith.cmpi eq, %1, %103 : vector<6x256xi32>
    %c20 = arith.constant 20 : index
    %105 = memref.load %arg2[%c20] : memref<28xf32, #tpu.memory_space<smem>>
    %106 = vector.broadcast %105 : f32 to vector<6x256xf32>
    %107 = arith.select %104, %106, %102 : vector<6x256xi1>, vector<6x256xf32>
    %c21_i32 = arith.constant 21 : i32
    %108 = vector.broadcast %c21_i32 : i32 to vector<6x256xi32>
    %109 = arith.cmpi eq, %1, %108 : vector<6x256xi32>
    %c21 = arith.constant 21 : index
    %110 = memref.load %arg2[%c21] : memref<28xf32, #tpu.memory_space<smem>>
    %111 = vector.broadcast %110 : f32 to vector<6x256xf32>
    %112 = arith.select %109, %111, %107 : vector<6x256xi1>, vector<6x256xf32>
    %c22_i32 = arith.constant 22 : i32
    %113 = vector.broadcast %c22_i32 : i32 to vector<6x256xi32>
    %114 = arith.cmpi eq, %1, %113 : vector<6x256xi32>
    %c22 = arith.constant 22 : index
    %115 = memref.load %arg2[%c22] : memref<28xf32, #tpu.memory_space<smem>>
    %116 = vector.broadcast %115 : f32 to vector<6x256xf32>
    %117 = arith.select %114, %116, %112 : vector<6x256xi1>, vector<6x256xf32>
    %c23_i32 = arith.constant 23 : i32
    %118 = vector.broadcast %c23_i32 : i32 to vector<6x256xi32>
    %119 = arith.cmpi eq, %1, %118 : vector<6x256xi32>
    %c23 = arith.constant 23 : index
    %120 = memref.load %arg2[%c23] : memref<28xf32, #tpu.memory_space<smem>>
    %121 = vector.broadcast %120 : f32 to vector<6x256xf32>
    %122 = arith.select %119, %121, %117 : vector<6x256xi1>, vector<6x256xf32>
    %c24_i32 = arith.constant 24 : i32
    %123 = vector.broadcast %c24_i32 : i32 to vector<6x256xi32>
    %124 = arith.cmpi eq, %1, %123 : vector<6x256xi32>
    %c24 = arith.constant 24 : index
    %125 = memref.load %arg2[%c24] : memref<28xf32, #tpu.memory_space<smem>>
    %126 = vector.broadcast %125 : f32 to vector<6x256xf32>
    %127 = arith.select %124, %126, %122 : vector<6x256xi1>, vector<6x256xf32>
    %c25_i32 = arith.constant 25 : i32
    %128 = vector.broadcast %c25_i32 : i32 to vector<6x256xi32>
    %129 = arith.cmpi eq, %1, %128 : vector<6x256xi32>
    %c25 = arith.constant 25 : index
    %130 = memref.load %arg2[%c25] : memref<28xf32, #tpu.memory_space<smem>>
    %131 = vector.broadcast %130 : f32 to vector<6x256xf32>
    %132 = arith.select %129, %131, %127 : vector<6x256xi1>, vector<6x256xf32>
    %c26_i32 = arith.constant 26 : i32
    %133 = vector.broadcast %c26_i32 : i32 to vector<6x256xi32>
    %134 = arith.cmpi eq, %1, %133 : vector<6x256xi32>
    %c26 = arith.constant 26 : index
    %135 = memref.load %arg2[%c26] : memref<28xf32, #tpu.memory_space<smem>>
    %136 = vector.broadcast %135 : f32 to vector<6x256xf32>
    %137 = arith.select %134, %136, %132 : vector<6x256xi1>, vector<6x256xf32>
    %c27_i32 = arith.constant 27 : i32
    %138 = vector.broadcast %c27_i32 : i32 to vector<6x256xi32>
    %139 = arith.cmpi eq, %1, %138 : vector<6x256xi32>
    %c27 = arith.constant 27 : index
    %140 = memref.load %arg2[%c27] : memref<28xf32, #tpu.memory_space<smem>>
    %141 = vector.broadcast %140 : f32 to vector<6x256xf32>
    %142 = arith.select %139, %141, %137 : vector<6x256xi1>, vector<6x256xf32>
    %cst_2 = arith.constant dense<0.000000e+00> : vector<256xf32>
    %143 = vector.multi_reduction <add>, %142, %cst_2 [0] : vector<6x256xf32> to vector<256xf32>
    %144 = vector.shape_cast %143 : vector<256xf32> to vector<1x256xf32>
    %cst_3 = arith.constant 0.166666672 : f32
    %145 = vector.broadcast %cst_3 : f32 to vector<1x256xf32>
    %146 = arith.mulf %144, %145 : vector<1x256xf32>
    %c0_4 = arith.constant 0 : index
    %147 = memref.load %arg3[%c0_4] : memref<1xf32, #tpu.memory_space<smem>>
    %148 = vector.broadcast %147 : f32 to vector<1x256xf32>
    %149 = arith.addf %146, %148 : vector<1x256xf32>
    %150 = arith.negf %149 : vector<1x256xf32>
    %151 = math.exp %150 : vector<1x256xf32>
    %cst_5 = arith.constant 1.000000e+00 : f32
    %152 = vector.broadcast %cst_5 : f32 to vector<1x256xf32>
    %153 = arith.addf %152, %151 : vector<1x256xf32>
    %154 = arith.divf %152, %153 : vector<1x256xf32>
    %c0_6 = arith.constant 0 : index
    %c0_7 = arith.constant 0 : index
    %155 = vector.load %arg4[%c0_6, %c0_7] : memref<1x256xf32, #tpu.memory_space<vmem>>, vector<1x256xf32>
    tpu.vector_store %arg4[%c0_6, %c0_7], %154 {strides = array<i32>} : memref<1x256xf32, #tpu.memory_space<vmem>>, vector<1x256xf32>,
    return
  }
  func.func @transform_0(%arg0: i32) -> (i32, i32) {
    %c0_i32 = arith.constant 0 : i32
    %c0_i32_0 = arith.constant 0 : i32
    return %c0_i32, %arg0 : i32, i32
  }
  func.func @transform_1(%arg0: i32) -> i32 {
    %c0_i32 = arith.constant 0 : i32
    %c0_i32_0 = arith.constant 0 : i32
    return %c0_i32 : i32
  }
  func.func @transform_2(%arg0: i32) -> i32 {
    %c0_i32 = arith.constant 0 : i32
    %c0_i32_0 = arith.constant 0 : i32
    return %c0_i32 : i32
  }
  func.func @transform_3(%arg0: i32) -> (i32, i32) {
    %c0_i32 = arith.constant 0 : i32
    %c0_i32_0 = arith.constant 0 : i32
    return %c0_i32, %arg0 : i32, i32
  }
}

</mosaic_0001>

<llo_original>
// kernel: tpu_custom_call.1
$region0: #{tpu_custom_call.1}
  #allocation0 [shape = 'u32[]', space=smem, size = 0x4, offset = 0x4, fixed_abs, tag = 'smem constant byte address 0x4 - core index']
  #allocation1 [shape = 'u32[72,128]{1,0:T(1,128)}', space=vmem, size = 0x9000, scoped, tag = 'internal scratch']
  #allocation2 [shape = 'f32[1]{0:T(128)S(6)}', space=smem, size = 0x200, scoped, tag = 'scoped memory for tpu_custom_call.1']
  %s0 = inlined_call_operand.hbm [shape: s8[6,256], index: 0, kind: input, shape index: {}]
  %s1 = inlined_call_operand.vmem [shape: f32[28], index: 1, kind: input, shape index: {}]
  %s2 = inlined_call_operand.<no memory space> [shape: f32[1], index: 2, kind: input, shape index: {}]
  %s3 = inlined_call_operand.hbm [shape: f32[1,256], index: 3, kind: output, shape index: {}]
  %s4 = sld [smem:[#allocation0]]
  $region30: #{tpu_custom_call.1} parent=0
    _
  %s6 = ssub.s32 1, %s4
  %s7 = scalar_select 0, %s6, %s4
  %8 = sst [smem:[#allocation2]] %s2
  $region1: #{tpu_custom_call.1} parent=0
    #allocation3 [shape = 'u8[2048]{0}', space=vmem, size = 0x800, scoped, tag = 'input window, operand 0, single buffered']
    #allocation4 [shape = 's32[1]{0}', space=sflag, size = 0x4, scoped, tag = 'scoped memory for tpu_custom_call.1']
    #allocation5 [shape = 's32[1]{0}', space=sflag, size = 0x4, scoped, tag = 'scoped memory for tpu_custom_call.1']
    #allocation6 [shape = 's32[1]{0}', space=sflag, size = 0x4, scoped, tag = 'scoped memory for tpu_custom_call.1']
    #allocation7 [shape = 'u8[512]{0}', space=smem, size = 0x200, scoped, tag = 'input window, operand 1, single buffered']
    #allocation8 [shape = 'u8[1024]{0}', space=vmem, size = 0x400, scoped, tag = 'output window, operand 0, single buffered']
    %9 = vsyncpa [#allocation4], 0
    %10 = vsyncpa [#allocation6], 0
    %11 = vsyncpa [#allocation5], 0
    // Predicated region
    $region2: #{tpu_custom_call.1} parent=1 // pred_check
      _
    $region3: #{tpu_custom_call.1} parent=1 // pred_check_branch
      %13 = sbr.rel (0) target = $region5
    $region4: #{tpu_custom_call.1} parent=1 // pred_region
      %15 = vsyncadd [#allocation4], 0
      %s17 = sshll.u32 %s0, 4
      %s18 = int_to_ptr.hbm [resolvable:$true] %s17
      %s19 = sshll.u32 [#allocation3], 4
      %s20 = int_to_ptr.vmem [resolvable:$true] %s19
      %22 = dma.hbm_to_vmem [thread:$0]  %s18, 64, %s20, [#allocation4]
    $region5: #{tpu_custom_call.1} parent=1 // pred_fallthru
      _
    // Predicated region
    $region6: #{tpu_custom_call.1} parent=1 // pred_check
      _
    $region7: #{tpu_custom_call.1} parent=1 // pred_check_branch
      %24 = sbr.rel (0) target = $region9
    $region8: #{tpu_custom_call.1} parent=1 // pred_region
      %26 = vsyncadd [#allocation6], 0
      %s28 = sshll.u32 %s1, 4
      %s29 = int_to_ptr.vmem [resolvable:$true] %s28
      %31 = dma.vmem_to_smem %s29, 16, [#allocation7], [#allocation6]
    $region9: #{tpu_custom_call.1} parent=1 // pred_fallthru
      _
    // Predicated region
    $region10: #{tpu_custom_call.1} parent=1 // pred_check
      _
    $region11: #{tpu_custom_call.1} parent=1 // pred_check_branch
      %33 = sbr.rel (0) target = $region13
    $region12: #{tpu_custom_call.1} parent=1 // pred_region
      _
    $region13: #{tpu_custom_call.1} parent=1 // pred_fallthru
      _
    // Predicated region
    $region14: #{tpu_custom_call.1} parent=1 // pred_check
      _
    $region15: #{tpu_custom_call.1} parent=1 // pred_check_branch
      %35 = sbr.rel (0) target = $region17
    $region16: #{tpu_custom_call.1} parent=1 // pred_region
      %37 = dma.done [#allocation4], 64
    $region17: #{tpu_custom_call.1} parent=1 // pred_fallthru
      _
    // Predicated region
    $region18: #{tpu_custom_call.1} parent=1 // pred_check
      _
    $region19: #{tpu_custom_call.1} parent=1 // pred_check_branch
      %39 = sbr.rel (0) target = $region21
    $region20: #{tpu_custom_call.1} parent=1 // pred_region
      %41 = dma.done [#allocation6], 16
    $region21: #{tpu_custom_call.1} parent=1 // pred_fallthru
      _
    %42 = sfence
    %v43 = vld [vmem:[#allocation3] sm:$0xf]
    %v44 = vunpack.c.0.s8 %v43
    %v45 = vunpack.c.1.s8 %v43
    %vm46 = vcmp.eq.s32.totalorder %v44, 0
    %vm47 = vcmp.eq.s32.totalorder %v45, 0
    %s48 = sld [smem:[#allocation7]]
    %v49 = vstv %s48
    %v50 = vsel %vm46, %v49, 0.0
    %v51 = vsel %vm47, %v49, 0.0
    %vm52 = vcmp.eq.s32.totalorder %v44, 1
    %vm53 = vcmp.eq.s32.totalorder %v45, 1
    %s54 = sld [smem:[#allocation7 + $0x1]]
    %v55 = vstv %s54
    %v56 = vsel %vm52, %v55, %v50
    %v57 = vsel %vm53, %v55, %v51
    %vm58 = vcmp.eq.s32.totalorder %v44, 2
    %vm59 = vcmp.eq.s32.totalorder %v45, 2
    %s60 = sld [smem:[#allocation7 + $0x2]]
    %v61 = vstv %s60
    %v62 = vsel %vm58, %v61, %v56
    %v63 = vsel %vm59, %v61, %v57
    %vm64 = vcmp.eq.s32.totalorder %v44, 3
    %vm65 = vcmp.eq.s32.totalorder %v45, 3
    %s66 = sld [smem:[#allocation7 + $0x3]]
    %v67 = vstv %s66
    %v68 = vsel %vm64, %v67, %v62
    %v69 = vsel %vm65, %v67, %v63
    %vm70 = vcmp.eq.s32.totalorder %v44, 4
    %vm71 = vcmp.eq.s32.totalorder %v45, 4
    %s72 = sld [smem:[#allocation7 + $0x4]]
    %v73 = vstv %s72
    %v74 = vsel %vm70, %v73, %v68
    %v75 = vsel %vm71, %v73, %v69
    %vm76 = vcmp.eq.s32.totalorder %v44, 5
    %vm77 = vcmp.eq.s32.totalorder %v45, 5
    %s78 = sld [smem:[#allocation7 + $0x5]]
    %v79 = vstv %s78
    %v80 = vsel %vm76, %v79, %v74
    %v81 = vsel %vm77, %v79, %v75
    %vm82 = vcmp.eq.s32.totalorder %v44, 6
    %vm83 = vcmp.eq.s32.totalorder %v45, 6
    %s84 = sld [smem:[#allocation7 + $0x6]]
    %v85 = vstv %s84
    %v86 = vsel %vm82, %v85, %v80
    %v87 = vsel %vm83, %v85, %v81
    %vm88 = vcmp.eq.s32.totalorder %v44, 7
    %vm89 = vcmp.eq.s32.totalorder %v45, 7
    %s90 = sld [smem:[#allocation7 + $0x7]]
    %v91 = vstv %s90
    %v92 = vsel %vm88, %v91, %v86
    %v93 = vsel %vm89, %v91, %v87
    %vm94 = vcmp.eq.s32.totalorder %v44, 8
    %vm95 = vcmp.eq.s32.totalorder %v45, 8
    %s96 = sld [smem:[#allocation7 + $0x8]]
    %v97 = vstv %s96
    %v98 = vsel %vm94, %v97, %v92
    %v99 = vsel %vm95, %v97, %v93
    %vm100 = vcmp.eq.s32.totalorder %v44, 9
    %vm101 = vcmp.eq.s32.totalorder %v45, 9
    %s102 = sld [smem:[#allocation7 + $0x9]]
    %v103 = vstv %s102
    %v104 = vsel %vm100, %v103, %v98
    %v105 = vsel %vm101, %v103, %v99
    %vm106 = vcmp.eq.s32.totalorder %v44, 10
    %vm107 = vcmp.eq.s32.totalorder %v45, 10
    %s108 = sld [smem:[#allocation7 + $0xa]]
    %v109 = vstv %s108
    %v110 = vsel %vm106, %v109, %v104
    %v111 = vsel %vm107, %v109, %v105
    %vm112 = vcmp.eq.s32.totalorder %v44, 11
    %vm113 = vcmp.eq.s32.totalorder %v45, 11
    %s114 = sld [smem:[#allocation7 + $0xb]]
    %v115 = vstv %s114
    %v116 = vsel %vm112, %v115, %v110
    %v117 = vsel %vm113, %v115, %v111
    %vm118 = vcmp.eq.s32.totalorder %v44, 12
    %vm119 = vcmp.eq.s32.totalorder %v45, 12
    %s120 = sld [smem:[#allocation7 + $0xc]]
    %v121 = vstv %s120
    %v122 = vsel %vm118, %v121, %v116
    %v123 = vsel %vm119, %v121, %v117
    %vm124 = vcmp.eq.s32.totalorder %v44, 13
    %vm125 = vcmp.eq.s32.totalorder %v45, 13
    %s126 = sld [smem:[#allocation7 + $0xd]]
    %v127 = vstv %s126
    %v128 = vsel %vm124, %v127, %v122
    %v129 = vsel %vm125, %v127, %v123
    %vm130 = vcmp.eq.s32.totalorder %v44, 14
    %vm131 = vcmp.eq.s32.totalorder %v45, 14
    %s132 = sld [smem:[#allocation7 + $0xe]]
    %v133 = vstv %s132
    %v134 = vsel %vm130, %v133, %v128
    %v135 = vsel %vm131, %v133, %v129
    %vm136 = vcmp.eq.s32.totalorder %v44, 15
    %vm137 = vcmp.eq.s32.totalorder %v45, 15
    %s138 = sld [smem:[#allocation7 + $0xf]]
    %v139 = vstv %s138
    %v140 = vsel %vm136, %v139, %v134
    %v141 = vsel %vm137, %v139, %v135
    %vm142 = vcmp.eq.s32.totalorder %v44, 16
    %vm143 = vcmp.eq.s32.totalorder %v45, 16
    %s144 = sld [smem:[#allocation7 + $0x10]]
    %v145 = vstv %s144
    %v146 = vsel %vm142, %v145, %v140
    %v147 = vsel %vm143, %v145, %v141
    %vm148 = vcmp.eq.s32.totalorder %v44, 17
    %vm149 = vcmp.eq.s32.totalorder %v45, 17
    %s150 = sld [smem:[#allocation7 + $0x11]]
    %v151 = vstv %s150
    %v152 = vsel %vm148, %v151, %v146
    %v153 = vsel %vm149, %v151, %v147
    %vm154 = vcmp.eq.s32.totalorder %v44, 18
    %vm155 = vcmp.eq.s32.totalorder %v45, 18
    %s156 = sld [smem:[#allocation7 + $0x12]]
    %v157 = vstv %s156
    %v158 = vsel %vm154, %v157, %v152
    %v159 = vsel %vm155, %v157, %v153
    %vm160 = vcmp.eq.s32.totalorder %v44, 19
    %vm161 = vcmp.eq.s32.totalorder %v45, 19
    %s162 = sld [smem:[#allocation7 + $0x13]]
    %v163 = vstv %s162
    %v164 = vsel %vm160, %v163, %v158
    %v165 = vsel %vm161, %v163, %v159
    %vm166 = vcmp.eq.s32.totalorder %v44, 20
    %vm167 = vcmp.eq.s32.totalorder %v45, 20
    %s168 = sld [smem:[#allocation7 + $0x14]]
    %v169 = vstv %s168
    %v170 = vsel %vm166, %v169, %v164
    %v171 = vsel %vm167, %v169, %v165
    %vm172 = vcmp.eq.s32.totalorder %v44, 21
    %vm173 = vcmp.eq.s32.totalorder %v45, 21
    %s174 = sld [smem:[#allocation7 + $0x15]]
    %v175 = vstv %s174
    %v176 = vsel %vm172, %v175, %v170
    %v177 = vsel %vm173, %v175, %v171
    %vm178 = vcmp.eq.s32.totalorder %v44, 22
    %vm179 = vcmp.eq.s32.totalorder %v45, 22
    %s180 = sld [smem:[#allocation7 + $0x16]]
    %v181 = vstv %s180
    %v182 = vsel %vm178, %v181, %v176
    %v183 = vsel %vm179, %v181, %v177
    %vm184 = vcmp.eq.s32.totalorder %v44, 23
    %vm185 = vcmp.eq.s32.totalorder %v45, 23
    %s186 = sld [smem:[#allocation7 + $0x17]]
    %v187 = vstv %s186
    %v188 = vsel %vm184, %v187, %v182
    %v189 = vsel %vm185, %v187, %v183
    %vm190 = vcmp.eq.s32.totalorder %v44, 24
    %vm191 = vcmp.eq.s32.totalorder %v45, 24
    %s192 = sld [smem:[#allocation7 + $0x18]]
    %v193 = vstv %s192
    %v194 = vsel %vm190, %v193, %v188
    %v195 = vsel %vm191, %v193, %v189
    %vm196 = vcmp.eq.s32.totalorder %v44, 25
    %vm197 = vcmp.eq.s32.totalorder %v45, 25
    %s198 = sld [smem:[#allocation7 + $0x19]]
    %v199 = vstv %s198
    %v200 = vsel %vm196, %v199, %v194
    %v201 = vsel %vm197, %v199, %v195
    %vm202 = vcmp.eq.s32.totalorder %v44, 26
    %vm203 = vcmp.eq.s32.totalorder %v45, 26
    %s204 = sld [smem:[#allocation7 + $0x1a]]
    %v205 = vstv %s204
    %v206 = vsel %vm202, %v205, %v200
    %v207 = vsel %vm203, %v205, %v201
    %vm208 = vcmp.eq.s32.totalorder %v44, 27
    %vm209 = vcmp.eq.s32.totalorder %v45, 27
    %s210 = sld [smem:[#allocation7 + $0x1b]]
    %v211 = vstv %s210
    %v212 = vsel %vm208, %v211, %v206
    %v213 = vsel %vm209, %v211, %v207
    %vm214 = vcmask 1045504
    %v215 = vsel %vm214, %v212, 0.0
    %v216 = vrot.slane %v215, 4
    %v217 = vadd.f32 %v215, %v216
    %v218 = vrot.slane %v217, 2
    %v219 = vadd.f32 %v217, %v218
    %v220 = vrot.slane %v219, 1
    %v221 = vadd.f32 %v219, %v220
    %v222 = vsel %vm214, %v213, 0.0
    %v223 = vrot.slane %v222, 4
    %v224 = vadd.f32 %v222, %v223
    %v225 = vrot.slane %v224, 2
    %v226 = vadd.f32 %v224, %v225
    %v227 = vrot.slane %v226, 1
    %v228 = vadd.f32 %v226, %v227
    %v229 = vmul.f32 %v221, 0.16666667
    %v230 = vmul.f32 %v228, 0.16666667
    %s231 = sld [smem:[#allocation2]]
    %v232 = vstv %s231
    %v233 = vadd.f32 %v229, %v232
    %v234 = vadd.f32 %v230, %v232
    %v235 = vxor.u32 %v233, 2147483648
    %v236 = vxor.u32 %v234, 2147483648
    %v237 = vmul.f32 %v235, 1.442695
    %v238 = vpow.pop %v237
    %v239 = vmul.f32 %v236, 1.442695
    %v240 = vpow.pop %v239
    %v241 = vadd.f32 %v238, 1.0
    %v242 = vadd.f32 %v240, 1.0
    %v243 = vrcp.pop %v241
    %v244 = vmul.f32 %v241, %v243
    %v245 = vsub.f32 1.0, %v244
    %v246 = vmul.f32 %v243, %v245
    %v247 = vadd.f32 %v243, %v246
    %vm248 = vweird.f32 %v241
    %vm249 = vweird.f32 %v243
    %vm250 = vmor %vm248, %vm249
    %v251 = vsel %vm250, %v243, %v247
    %v252 = vand.u32 2147483647, %v241
    %vm253 = vcmp.eq.f32.partialorder %v252, 8.507059e+37
    %v254 = vand.u32 %v241, 2147483648
    %v255 = vor.u32 1.1754944e-38, %v254
    %v256 = vsel %vm253, %v255, %v251
    %v257 = vmul.f32 1.0, %v256
    %v258 = vrcp.pop %v242
    %v259 = vmul.f32 %v242, %v258
    %v260 = vsub.f32 1.0, %v259
    %v261 = vmul.f32 %v258, %v260
    %v262 = vadd.f32 %v258, %v261
    %vm263 = vweird.f32 %v242
    %vm264 = vweird.f32 %v258
    %vm265 = vmor %vm263, %vm264
    %v266 = vsel %vm265, %v258, %v262
    %v267 = vand.u32 2147483647, %v242
    %vm268 = vcmp.eq.f32.partialorder %v267, 8.507059e+37
    %v269 = vand.u32 %v242, 2147483648
    %v270 = vor.u32 1.1754944e-38, %v269
    %v271 = vsel %vm268, %v270, %v266
    %v272 = vmul.f32 1.0, %v271
    %v275 = vrot.slane %v272, 7
    %vm276 = vcmask 1040384
    %v277 = vsel %vm276, %v257, %v275
    %v279 = vlaneseq
    %vm280 = vcmp.ge.s32.totalorder %v279, 0
    %vm281 = vcmp.lt.s32.totalorder %v279, 256
    %vm282 = vmand %vm280, %vm281
    %283 = vst.msk [vmem:[#allocation8] sm:$0x3] %vm282, %v277
    // Predicated region
    $region22: #{tpu_custom_call.1} parent=1 // pred_check
      _
    $region23: #{tpu_custom_call.1} parent=1 // pred_check_branch
      %285 = sbr.rel (0) target = $region25
    $region24: #{tpu_custom_call.1} parent=1 // pred_region
      %287 = vsyncadd [#allocation5], 0
      %s289 = sshll.u32 [#allocation8], 4
      %s290 = int_to_ptr.vmem [resolvable:$true] %s289
      %s291 = sshll.u32 %s3, 4
      %s292 = int_to_ptr.hbm [resolvable:$true] %s291
      %294 = dma.vmem_to_hbm [thread:$0]  %s290, 32, %s292, [#allocation5]
    $region25: #{tpu_custom_call.1} parent=1 // pred_fallthru
      _
    // Predicated region
    $region26: #{tpu_custom_call.1} parent=1 // pred_check
      _
    $region27: #{tpu_custom_call.1} parent=1 // pred_check_branch
      %296 = sbr.rel (0) target = $region29
    $region28: #{tpu_custom_call.1} parent=1 // pred_region
      %298 = dma.done [#allocation5], 32
    $region29: #{tpu_custom_call.1} parent=1 // pred_fallthru
      _
    %299 = vsyncpa [#allocation4], 1
    %300 = vsyncpa [#allocation5], 1
    %301 = vsyncpa [#allocation6], 1

</llo_original>
